<compile_context>
chip_gen: v7x
topology: tpu7x:2x2x1
jax: 0.10.0
libtpu: 0.0.40
codegen_flags: <defaults>
</compile_context>

<pallas_src>
import jax
import jax.numpy as jnp
from jax.experimental import pallas as pl
from jax.experimental.pallas import tpu as pltpu

_LANES = 128                       # vreg lane width
_TARGET_BLOCK_BYTES = 2 << 20      # ~2 MiB per (block_rows, 128) block
_PALLAS_MIN_ELEMENTS = 1 << 20     # below this, fused jnp.abs beats launch cost


def _sublanes_for(dtype) -> int:
    """Minimum sublane tile for a dtype: f32 -> 8, bf16 -> 16, int8/fp8 -> 32."""
    itemsize = jnp.dtype(dtype).itemsize
    return max(8, 32 // itemsize)


def _abs_kernel(p_ref, o_ref):
    # elementwise |x| on the VPU -- one VALU op per vreg, HBM-bandwidth bound
    o_ref[...] = jnp.abs(p_ref[...])


def _run_abs_2d(x2d: jax.Array) -> jax.Array:
    """Tiled |x| over a lane-dense (rows, 128) view. Ragged rows are fine."""
    rows, lanes = x2d.shape
    assert lanes == _LANES
    itemsize = jnp.dtype(x2d.dtype).itemsize
    sublanes = _sublanes_for(x2d.dtype)

    # Largest block (multiple of `sublanes` rows) targeting ~2 MiB so that
    # double-buffered input + output blocks (~4x block) stay well under the
    # 16 MiB scoped-VMEM default on v5e.
    max_block_rows = max(
        sublanes,
        (_TARGET_BLOCK_BYTES // (_LANES * itemsize)) // sublanes * sublanes,
    )

    # Keep >= 2 grid steps when there is enough work so the "parallel" axis
    # can shard across v7x's two TensorCores (no-op on v5e/v6e single-TC).
    min_blocks = 2 if rows >= 2 * sublanes else 1
    num_blocks = max(pl.cdiv(rows, max_block_rows), min_blocks)
    block_rows = pl.cdiv(rows, num_blocks)
    block_rows = ((block_rows + sublanes - 1) // sublanes) * sublanes
    block_rows = min(block_rows, max_block_rows)

    # Ragged last block (rows % block_rows != 0) is masked by Pallas -- no
    # row padding, no wasted HBM traffic.
    grid = (pl.cdiv(rows, block_rows),)

    return pl.pallas_call(
        _abs_kernel,
        out_shape=jax.ShapeDtypeStruct((rows, _LANES), x2d.dtype),
        grid=grid,
        in_specs=[pl.BlockSpec((block_rows, _LANES), lambda i: (i, 0))],
        out_specs=pl.BlockSpec((block_rows, _LANES), lambda i: (i, 0)),
        compiler_params=pltpu.CompilerParams(
            dimension_semantics=("parallel",),
        ),
        cost_estimate=pl.CostEstimate(
            flops=rows * _LANES,
            transcendentals=0,
            bytes_accessed=2 * rows * _LANES * itemsize,
        ),
    )(x2d)


def _abs_pallas(params: jax.Array) -> jax.Array:
    """|params| via a tiled, lane-dense Pallas TPU kernel (any shape)."""
    orig_shape = params.shape
    n = params.size
    sublanes = _sublanes_for(params.dtype)

    if n % _LANES == 0 and (n // _LANES) >= sublanes:
        # Copy-free fast path: contiguous reshape to (rows, 128) is a bitcast,
        # so traffic is exactly one HBM read + one HBM write.
        rows = n // _LANES
        out2d = _run_abs_2d(params.reshape(rows, _LANES))
        return out2d.reshape(orig_shape)

    # Lane-misaligned sizes: minimal pad to one sublane tile, then slice back.
    # Only hit when the kernel is forced on tiny / ragged vectors (the default
    # dispatch sends those through fused jnp.abs).
    tile = sublanes * _LANES
    padded = ((n + tile - 1) // tile) * tile
    flat = params.reshape(-1)
    flat_padded = jnp.pad(flat, (0, padded - n))
    out2d = _run_abs_2d(flat_padded.reshape(padded // _LANES, _LANES))
    return out2d.reshape(padded)[:n].reshape(orig_shape)


def positive_parameters_forward(params: jax.Array, *,
                                force_pallas: bool = False) -> jax.Array:
    """Returns |params|, matching PositiveParameters.forward().

    For small parameter vectors (the LearnedPGD step-size case, ~8 elements)
    a fused jnp.abs is faster than any kernel launch; large arrays go through
    the tiled Pallas kernel.  `force_pallas=True` always uses the kernel.
    """
    if not force_pallas and params.size < _PALLAS_MIN_ELEMENTS:
        return jnp.abs(params)
    return _abs_pallas(params)


class PositiveParametersJax:
    """JAX analogue of spyrit's PositiveParameters module."""

    def __init__(self, params, use_pallas: bool = True):
        # Deterministic parameter storage (signed values), like nn.Module init.
        self.params = jnp.asarray(params, dtype=jnp.float32)
        self.use_pallas = use_pallas

    def __call__(self):
        return positive_parameters_forward(self.params,
                                           force_pallas=self.use_pallas)


if __name__ == "__main__":
    key = jax.random.PRNGKey(0)
    k1, k2, k3 = jax.random.split(key, 3)

    # 1) The real spyrit use case: a small signed step-size vector
    #    (one step size per unrolled LearnedPGD iteration), forced through
    #    the kernel so the Pallas path is exercised.
    n_steps = 8
    signed_values = jax.random.normal(k1, (n_steps,), dtype=jnp.float32) * 2.0
    module = PositiveParametersJax(signed_values, use_pallas=True)
    result = module()
    jax.block_until_ready(result)
    ref = jnp.abs(module.params)
    assert result.shape == ref.shape and result.dtype == ref.dtype
    assert bool(jnp.allclose(result, ref)), "mismatch vs reference abs (n=8)"

    # 2) A non-multiple-of-128 size to exercise the minimal-pad ragged path.
    signed_rag = jax.random.normal(k2, (300,), dtype=jnp.float32) * 3.0
    out_rag = positive_parameters_forward(signed_rag, force_pallas=True)
    jax.block_until_ready(out_rag)
    assert bool(jnp.allclose(out_rag, jnp.abs(signed_rag))), \
        "mismatch vs reference abs (n=300)"

    # 3) A lane-aligned 2D shape exercising the copy-free fast path, the
    #    2-step parallel grid, and the masked ragged last block (rows=130).
    signed_2d = jax.random.normal(k3, (65, 256), dtype=jnp.float32)
    out_2d = positive_parameters_forward(signed_2d, force_pallas=True)
    jax.block_until_ready(out_2d)
    assert out_2d.shape == signed_2d.shape
    assert bool(jnp.allclose(out_2d, jnp.abs(signed_2d))), \
        "mismatch vs reference abs (65x256)"

    print("KERNEL_OK")
</pallas_src>

<mosaic_0001>
module attributes {stable_mosaic.version = 11 : i64} {
  func.func @_abs_kernel(%arg0: i32, %arg1: memref<8x128xf32, #tpu.memory_space<vmem>>, %arg2: memref<8x128xf32, #tpu.memory_space<vmem>>) attributes {dimension_semantics = [#tpu.dimension_semantics<parallel>], iteration_bounds = array<i64: 1>, scalar_prefetch = 0 : i64, scratch_operands = 0 : i64, tpu.core_type = #tpu.core_type<tc>, window_params = [{transform_indices = @transform_0, window_bounds = array<i64: 8, 128>}, {transform_indices = @transform_1, window_bounds = array<i64: 8, 128>}]} {
    %c0 = arith.constant 0 : index
    %c0_0 = arith.constant 0 : index
    %0 = vector.load %arg1[%c0, %c0_0] : memref<8x128xf32, #tpu.memory_space<vmem>>, vector<8x128xf32>
    %1 = math.absf %0 : vector<8x128xf32>
    %c0_1 = arith.constant 0 : index
    %c0_2 = arith.constant 0 : index
    %2 = vector.load %arg2[%c0_1, %c0_2] : memref<8x128xf32, #tpu.memory_space<vmem>>, vector<8x128xf32>
    tpu.vector_store %arg2[%c0_1, %c0_2], %1 {strides = array<i32>} : memref<8x128xf32, #tpu.memory_space<vmem>>, vector<8x128xf32>,
    return
  }
  func.func @transform_0(%arg0: i32) -> (i32, i32) {
    %c0_i32 = arith.constant 0 : i32
    %c0_i32_0 = arith.constant 0 : i32
    return %arg0, %c0_i32 : i32, i32
  }
  func.func @transform_1(%arg0: i32) -> (i32, i32) {
    %c0_i32 = arith.constant 0 : i32
    %c0_i32_0 = arith.constant 0 : i32
    return %arg0, %c0_i32 : i32, i32
  }
}

</mosaic_0001>

<llo_original>
// kernel: tpu_custom_call.1
$region0: #{tpu_custom_call.1}
  #allocation0 [shape = 'u32[]', space=smem, size = 0x4, offset = 0x4, fixed_abs, tag = 'smem constant byte address 0x4 - core index']
  #allocation1 [shape = 'u32[144,128]{1,0:T(1,128)}', space=vmem, size = 0x12000, scoped, tag = 'internal scratch']
  %s0 = inlined_call_operand.hbm [shape: f32[8,128], index: 0, kind: input, shape index: {}]
  %s1 = inlined_call_operand.hbm [shape: f32[8,128], index: 1, kind: output, shape index: {}]
  %s2 = sld [smem:[#allocation0]]
  $region18: #{tpu_custom_call.1} parent=0
    _
  %s4 = ssub.s32 1, %s2
  %s5 = scalar_select 0, %s4, %s2
  $region1: #{tpu_custom_call.1} parent=0
    #allocation2 [shape = 'u8[4096]{0}', space=vmem, size = 0x1000, scoped, tag = 'input window, operand 0, single buffered']
    #allocation3 [shape = 's32[1]{0}', space=sflag, size = 0x4, scoped, tag = 'scoped memory for tpu_custom_call.1']
    #allocation4 [shape = 's32[1]{0}', space=sflag, size = 0x4, scoped, tag = 'scoped memory for tpu_custom_call.1']
    #allocation5 [shape = 'u8[4096]{0}', space=vmem, size = 0x1000, scoped, tag = 'output window, operand 0, single buffered']
    %6 = vsyncpa [#allocation3], 0
    %7 = vsyncpa [#allocation4], 0
    // Predicated region
    $region2: #{tpu_custom_call.1} parent=1 // pred_check
      _
    $region3: #{tpu_custom_call.1} parent=1 // pred_check_branch
      %9 = sbr.rel (0) target = $region5
    $region4: #{tpu_custom_call.1} parent=1 // pred_region
      %s11 = ssub.s32 128, 128
      %12 = vsyncadd [#allocation3], %s11
      %s14 = sshll.u32 [#allocation2], 4
      %s15 = int_to_ptr.vmem [resolvable:$true] %s14
      %17 = dma.hbm_to_vmem [thread:$0]  %s0, 128, %s15, [#allocation3]
    $region5: #{tpu_custom_call.1} parent=1 // pred_fallthru
      _
    // Predicated region
    $region6: #{tpu_custom_call.1} parent=1 // pred_check
      _
    $region7: #{tpu_custom_call.1} parent=1 // pred_check_branch
      %19 = sbr.rel (0) target = $region9
    $region8: #{tpu_custom_call.1} parent=1 // pred_region
      %20 = dma.done [#allocation3], 128
    $region9: #{tpu_custom_call.1} parent=1 // pred_fallthru
      _
    %v21 = vld [vmem:[#allocation2] sm:$0xff]
    %v22 = vand.u32 2147483647, %v21
    %23 = vst [vmem:[#allocation5] sm:$0xff] %v22
    // Predicated region
    $region10: #{tpu_custom_call.1} parent=1 // pred_check
      _
    $region11: #{tpu_custom_call.1} parent=1 // pred_check_branch
      %25 = sbr.rel (0) target = $region13
    $region12: #{tpu_custom_call.1} parent=1 // pred_region
      %s27 = ssub.s32 128, 128
      %28 = vsyncadd [#allocation4], %s27
      %s30 = sshll.u32 [#allocation5], 4
      %s31 = int_to_ptr.vmem [resolvable:$true] %s30
      %33 = dma.vmem_to_hbm [thread:$0]  %s31, 128, %s1, [#allocation4]
    $region13: #{tpu_custom_call.1} parent=1 // pred_fallthru
      _
    // Predicated region
    $region14: #{tpu_custom_call.1} parent=1 // pred_check
      _
    $region15: #{tpu_custom_call.1} parent=1 // pred_check_branch
      %35 = sbr.rel (0) target = $region17
    $region16: #{tpu_custom_call.1} parent=1 // pred_region
      %36 = dma.done [#allocation4], 128
    $region17: #{tpu_custom_call.1} parent=1 // pred_fallthru
      _
    %37 = vsyncpa [#allocation3], 1
    %38 = vsyncpa [#allocation4], 1

</llo_original>
